<compile_context>
chip_gen: v7x
topology: tpu7x:2x2x1
jax: 0.10.0
libtpu: 0.0.40
codegen_flags: <defaults>
</compile_context>

<pallas_src>
import functools

import jax
import jax.numpy as jnp
from jax.experimental import pallas as pl
from jax.experimental.pallas import tpu as pltpu

LANE = 128      # vreg lane width (last dim)
SUBLANE = 8     # vreg sublane width (second-to-last dim, f32)


def _round_up(x, m):
    return ((x + m - 1) // m) * m


def mlp_kernel(x_ref, w1_ref, b1_ref, w2_ref, b2_ref, w3_ref, b3_ref, o_ref,
               *, compute_dtype):
    """One batch tile: fc1 -> ReLU -> fc2 -> ReLU -> fc3, fully fused in VMEM."""
    x = x_ref[...]
    if compute_dtype is not None:            # narrow MXU operand for streamed x
        x = x.astype(compute_dtype)

    # Weights arrive already in compute_dtype (wrapper-side one-time cast).
    h1 = jnp.dot(x, w1_ref[...], preferred_element_type=jnp.float32) + b1_ref[...]
    h1 = jnp.maximum(h1, 0.0)                # ReLU 1 in f32 (VPU)
    if compute_dtype is not None:
        h1 = h1.astype(compute_dtype)

    h2 = jnp.dot(h1, w2_ref[...], preferred_element_type=jnp.float32) + b2_ref[...]
    h2 = jnp.maximum(h2, 0.0)                # ReLU 2 in f32 (VPU)
    if compute_dtype is not None:
        h2 = h2.astype(compute_dtype)

    out = jnp.dot(h2, w3_ref[...], preferred_element_type=jnp.float32) + b3_ref[...]
    o_ref[...] = out.astype(o_ref.dtype)


def mlp_forward(x, params, *, block_b=1024, compute_dtype=None):
    """Run the fused MLP. x: [B, input_size]. Returns [B, output_size].

    compute_dtype=jnp.bfloat16 narrows MXU operands (f32 accumulation kept) —
    recommended for large, MXU-bound batches on v6e/v7x.
    """
    w1, b1, w2, b2, w3, b3 = params
    B, K = x.shape
    H1 = w1.shape[1]
    H2 = w2.shape[1]
    NO = w3.shape[1]

    # --- Lane-pad every layer's output dim to 128 (exact: zero padding). ---
    # (If profiling shows the kernel MXU-bound, H2 could stay at 32; kept
    #  padded here for lane-dense layouts and simplicity.)
    H1p = _round_up(H1, LANE)
    H2p = _round_up(H2, LANE)
    NOp = _round_up(NO, LANE)

    w1p = jnp.pad(w1, ((0, 0), (0, H1p - H1)))
    b1p = jnp.pad(b1, ((0, 0), (0, H1p - H1)))
    w2p = jnp.pad(w2, ((0, H1p - H1), (0, H2p - H2)))
    b2p = jnp.pad(b2, ((0, 0), (0, H2p - H2)))
    w3p = jnp.pad(w3, ((0, H2p - H2), (0, NOp - NO)))
    b3p = jnp.pad(b3, ((0, 0), (0, NOp - NO)))

    # One-time wrapper-side weight cast (grid-invariant; avoids per-step VPU
    # casts and halves weight DMA bytes in bf16 mode). Biases stay f32.
    if compute_dtype is not None:
        w1p = w1p.astype(compute_dtype)
        w2p = w2p.astype(compute_dtype)
        w3p = w3p.astype(compute_dtype)

    # --- Batch tiling: no padding of x; Pallas masks the partial last tile. ---
    if B > LANE:
        # Keep TB a multiple of 128, but never so large that grid < 2
        # (keeps the second TensorCore busy on v7x megacore).
        tb_cap = _round_up(pl.cdiv(B, 2), LANE)
        TB = max(LANE, _round_up(min(block_b, tb_cap), LANE))
    else:
        TB = _round_up(max(B, 1), SUBLANE)
    grid = (pl.cdiv(B, TB),)

    # Scheduler hint for XLA.
    flops = 2 * B * (K * H1p + H1p * H2p + H2p * NOp)
    act_bytes = jnp.dtype(x.dtype).itemsize
    w_bytes = jnp.dtype(w1p.dtype).itemsize
    bytes_accessed = (
        act_bytes * (B * K + B * NOp)
        + w_bytes * (K * H1p + H1p * H2p + H2p * NOp)
        + 4 * (H1p + H2p + NOp))
    cost = pl.CostEstimate(flops=flops, transcendentals=0,
                           bytes_accessed=bytes_accessed)

    kernel = functools.partial(mlp_kernel, compute_dtype=compute_dtype)

    out_p = pl.pallas_call(
        kernel,
        out_shape=jax.ShapeDtypeStruct((B, NOp), x.dtype),
        grid=grid,
        in_specs=[
            pl.BlockSpec((TB, K), lambda i: (i, 0)),      # x: streamed per tile
            pl.BlockSpec((K, H1p), lambda i: (0, 0)),     # w1: VMEM-resident
            pl.BlockSpec((1, H1p), lambda i: (0, 0)),     # b1
            pl.BlockSpec((H1p, H2p), lambda i: (0, 0)),   # w2
            pl.BlockSpec((1, H2p), lambda i: (0, 0)),     # b2
            pl.BlockSpec((H2p, NOp), lambda i: (0, 0)),   # w3
            pl.BlockSpec((1, NOp), lambda i: (0, 0)),     # b3
        ],
        out_specs=pl.BlockSpec((TB, NOp), lambda i: (i, 0)),
        compiler_params=pltpu.CompilerParams(
            dimension_semantics=("parallel",)),           # megacore-shard batch
        cost_estimate=cost,
    )(x, w1p, b1p, w2p, b2p, w3p, b3p)

    # Slice away only the lane padding (cheap; batch dim is already exact).
    return out_p[:, :NO]


def init_params(key, input_size, hidden_size, output_size, dtype=jnp.float32):
    """Deterministic PyTorch-style init: U(-1/sqrt(fan_in), 1/sqrt(fan_in))."""
    def linear(key, fan_in, fan_out):
        kw, kb = jax.random.split(key)
        bound = 1.0 / jnp.sqrt(jnp.asarray(fan_in, dtype))
        # Stored as [in, out] (transpose of PyTorch layout) for x @ W.
        w = jax.random.uniform(kw, (fan_in, fan_out), dtype, -bound, bound)
        b = jax.random.uniform(kb, (1, fan_out), dtype, -bound, bound)
        return w, b

    k1, k2, k3 = jax.random.split(key, 3)
    w1, b1 = linear(k1, input_size, hidden_size)
    w2, b2 = linear(k2, hidden_size, 32)        # fc2: hidden -> 32 (fixed in module)
    w3, b3 = linear(k3, 32, output_size)
    return (w1, b1, w2, b2, w3, b3)


def mlp_reference(x, params):
    w1, b1, w2, b2, w3, b3 = params
    h1 = jnp.maximum(x @ w1 + b1, 0.0)
    h2 = jnp.maximum(h1 @ w2 + b2, 0.0)
    return h2 @ w3 + b3


if __name__ == "__main__":
    input_size, hidden_size, output_size = 64, 128, 16
    batch = 10          # deliberately not tile-aligned: exercises partial block

    key = jax.random.PRNGKey(0)
    k_params, k_x = jax.random.split(key)

    params = init_params(k_params, input_size, hidden_size, output_size)
    x = jax.random.normal(k_x, (batch, input_size), dtype=jnp.float32)

    # f32 operands here (tiny batch, exact check); pass
    # compute_dtype=jnp.bfloat16 for large MXU-bound batches on v6e/v7x.
    out = mlp_forward(x, params)
    out = jax.block_until_ready(out)

    ref = mlp_reference(x, params)
    assert out.shape == (batch, output_size)
    assert jnp.allclose(out, ref, atol=1e-5, rtol=1e-5)

    print("KERNEL_OK")
</pallas_src>

<mosaic_0001>
module attributes {stable_mosaic.version = 11 : i64} {
  func.func @mlp_kernel(%arg0: i32, %arg1: memref<16x64xf32, #tpu.memory_space<vmem>>, %arg2: memref<64x128xf32, #tpu.memory_space<vmem>>, %arg3: memref<1x128xf32, #tpu.memory_space<vmem>>, %arg4: memref<128x128xf32, #tpu.memory_space<vmem>>, %arg5: memref<1x128xf32, #tpu.memory_space<vmem>>, %arg6: memref<128x128xf32, #tpu.memory_space<vmem>>, %arg7: memref<1x128xf32, #tpu.memory_space<vmem>>, %arg8: memref<16x128xf32, #tpu.memory_space<vmem>>) attributes {dimension_semantics = [#tpu.dimension_semantics<parallel>], iteration_bounds = array<i64: 1>, scalar_prefetch = 0 : i64, scratch_operands = 0 : i64, tpu.core_type = #tpu.core_type<tc>, window_params = [{transform_indices = @transform_0, window_bounds = array<i64: 16, 64>}, {pipeline_mode = #tpu.pipeline_mode<synchronous>, transform_indices = @transform_1, window_bounds = array<i64: 64, 128>}, {pipeline_mode = #tpu.pipeline_mode<synchronous>, transform_indices = @transform_2, window_bounds = array<i64: 1, 128>}, {pipeline_mode = #tpu.pipeline_mode<synchronous>, transform_indices = @transform_3, window_bounds = array<i64: 128, 128>}, {pipeline_mode = #tpu.pipeline_mode<synchronous>, transform_indices = @transform_4, window_bounds = array<i64: 1, 128>}, {pipeline_mode = #tpu.pipeline_mode<synchronous>, transform_indices = @transform_5, window_bounds = array<i64: 128, 128>}, {pipeline_mode = #tpu.pipeline_mode<synchronous>, transform_indices = @transform_6, window_bounds = array<i64: 1, 128>}, {transform_indices = @transform_7, window_bounds = array<i64: 16, 128>}]} {
    %c0 = arith.constant 0 : index
    %c0_0 = arith.constant 0 : index
    %0 = vector.load %arg1[%c0, %c0_0] : memref<16x64xf32, #tpu.memory_space<vmem>>, vector<16x64xf32>
    %c0_1 = arith.constant 0 : index
    %c0_2 = arith.constant 0 : index
    %1 = vector.load %arg2[%c0_1, %c0_2] : memref<64x128xf32, #tpu.memory_space<vmem>>, vector<64x128xf32>
    %cst = arith.constant dense<0.000000e+00> : vector<16x128xf32>
    %2 = tpu.matmul %0, %1, %cst {dimension_numbers = #tpu.dot_dimension_numbers<[1], [0], [0], [1], [0, 0, 1, 1], [], []>} : vector<16x64xf32>, vector<64x128xf32>, vector<16x128xf32> -> vector<16x128xf32>
    %c0_3 = arith.constant 0 : index
    %c0_4 = arith.constant 0 : index
    %3 = vector.load %arg3[%c0_3, %c0_4] : memref<1x128xf32, #tpu.memory_space<vmem>>, vector<1x128xf32>
    %4 = vector.broadcast %3 : vector<1x128xf32> to vector<16x128xf32>
    %5 = arith.addf %2, %4 : vector<16x128xf32>
    %cst_5 = arith.constant 0.000000e+00 : f32
    %6 = vector.broadcast %cst_5 : f32 to vector<16x128xf32>
    %7 = arith.maximumf %5, %6 : vector<16x128xf32>
    %c0_6 = arith.constant 0 : index
    %c0_7 = arith.constant 0 : index
    %8 = vector.load %arg4[%c0_6, %c0_7] : memref<128x128xf32, #tpu.memory_space<vmem>>, vector<128x128xf32>
    %cst_8 = arith.constant dense<0.000000e+00> : vector<16x128xf32>
    %9 = tpu.matmul %7, %8, %cst_8 {dimension_numbers = #tpu.dot_dimension_numbers<[1], [0], [0], [1], [0, 0, 1, 1], [], []>} : vector<16x128xf32>, vector<128x128xf32>, vector<16x128xf32> -> vector<16x128xf32>
    %c0_9 = arith.constant 0 : index
    %c0_10 = arith.constant 0 : index
    %10 = vector.load %arg5[%c0_9, %c0_10] : memref<1x128xf32, #tpu.memory_space<vmem>>, vector<1x128xf32>
    %11 = vector.broadcast %10 : vector<1x128xf32> to vector<16x128xf32>
    %12 = arith.addf %9, %11 : vector<16x128xf32>
    %cst_11 = arith.constant 0.000000e+00 : f32
    %13 = vector.broadcast %cst_11 : f32 to vector<16x128xf32>
    %14 = arith.maximumf %12, %13 : vector<16x128xf32>
    %c0_12 = arith.constant 0 : index
    %c0_13 = arith.constant 0 : index
    %15 = vector.load %arg6[%c0_12, %c0_13] : memref<128x128xf32, #tpu.memory_space<vmem>>, vector<128x128xf32>
    %cst_14 = arith.constant dense<0.000000e+00> : vector<16x128xf32>
    %16 = tpu.matmul %14, %15, %cst_14 {dimension_numbers = #tpu.dot_dimension_numbers<[1], [0], [0], [1], [0, 0, 1, 1], [], []>} : vector<16x128xf32>, vector<128x128xf32>, vector<16x128xf32> -> vector<16x128xf32>
    %c0_15 = arith.constant 0 : index
    %c0_16 = arith.constant 0 : index
    %17 = vector.load %arg7[%c0_15, %c0_16] : memref<1x128xf32, #tpu.memory_space<vmem>>, vector<1x128xf32>
    %18 = vector.broadcast %17 : vector<1x128xf32> to vector<16x128xf32>
    %19 = arith.addf %16, %18 : vector<16x128xf32>
    %c0_17 = arith.constant 0 : index
    %c0_18 = arith.constant 0 : index
    %20 = vector.load %arg8[%c0_17, %c0_18] : memref<16x128xf32, #tpu.memory_space<vmem>>, vector<16x128xf32>
    tpu.vector_store %arg8[%c0_17, %c0_18], %19 {strides = array<i32>} : memref<16x128xf32, #tpu.memory_space<vmem>>, vector<16x128xf32>,
    return
  }
  func.func @transform_0(%arg0: i32) -> (i32, i32) {
    %c0_i32 = arith.constant 0 : i32
    %c0_i32_0 = arith.constant 0 : i32
    return %arg0, %c0_i32 : i32, i32
  }
  func.func @transform_1(%arg0: i32) -> (i32, i32) {
    %c0_i32 = arith.constant 0 : i32
    %c0_i32_0 = arith.constant 0 : i32
    %c0_i32_1 = arith.constant 0 : i32
    return %c0_i32, %c0_i32_0 : i32, i32
  }
  func.func @transform_2(%arg0: i32) -> (i32, i32) {
    %c0_i32 = arith.constant 0 : i32
    %c0_i32_0 = arith.constant 0 : i32
    %c0_i32_1 = arith.constant 0 : i32
    return %c0_i32, %c0_i32_0 : i32, i32
  }
  func.func @transform_3(%arg0: i32) -> (i32, i32) {
    %c0_i32 = arith.constant 0 : i32
    %c0_i32_0 = arith.constant 0 : i32
    %c0_i32_1 = arith.constant 0 : i32
    return %c0_i32, %c0_i32_0 : i32, i32
  }
  func.func @transform_4(%arg0: i32) -> (i32, i32) {
    %c0_i32 = arith.constant 0 : i32
    %c0_i32_0 = arith.constant 0 : i32
    %c0_i32_1 = arith.constant 0 : i32
    return %c0_i32, %c0_i32_0 : i32, i32
  }
  func.func @transform_5(%arg0: i32) -> (i32, i32) {
    %c0_i32 = arith.constant 0 : i32
    %c0_i32_0 = arith.constant 0 : i32
    %c0_i32_1 = arith.constant 0 : i32
    return %c0_i32, %c0_i32_0 : i32, i32
  }
  func.func @transform_6(%arg0: i32) -> (i32, i32) {
    %c0_i32 = arith.constant 0 : i32
    %c0_i32_0 = arith.constant 0 : i32
    %c0_i32_1 = arith.constant 0 : i32
    return %c0_i32, %c0_i32_0 : i32, i32
  }
  func.func @transform_7(%arg0: i32) -> (i32, i32) {
    %c0_i32 = arith.constant 0 : i32
    %c0_i32_0 = arith.constant 0 : i32
    return %arg0, %c0_i32 : i32, i32
  }
}

</mosaic_0001>

<llo_original>
// kernel: tpu_custom_call.1
$region0: #{tpu_custom_call.1}
  #allocation0 [shape = 'u32[]', space=smem, size = 0x4, offset = 0x4, fixed_abs, tag = 'smem constant byte address 0x4 - core index']
  #allocation1 [shape = 'u32[144,128]{1,0:T(1,128)}', space=vmem, size = 0x12000, scoped, tag = 'internal scratch']
  %s0 = inlined_call_operand.hbm [shape: f32[10,64], index: 0, kind: input, shape index: {}]
  %s1 = inlined_call_operand.hbm [shape: f32[64,128], index: 1, kind: input, shape index: {}]
  %s2 = inlined_call_operand.vmem [shape: f32[1,128], index: 2, kind: input, shape index: {}]
  %s3 = inlined_call_operand.hbm [shape: f32[128,128], index: 3, kind: input, shape index: {}]
  %s4 = inlined_call_operand.vmem [shape: f32[1,128], index: 4, kind: input, shape index: {}]
  %s5 = inlined_call_operand.hbm [shape: f32[128,128], index: 5, kind: input, shape index: {}]
  %s6 = inlined_call_operand.vmem [shape: f32[1,128], index: 6, kind: input, shape index: {}]
  %s7 = inlined_call_operand.hbm [shape: f32[10,128], index: 7, kind: output, shape index: {}]
  %s8 = sld [smem:[#allocation0]]
  $region54: #{tpu_custom_call.1} parent=0
    _
  %s10 = ssub.s32 1, %s8
  %s11 = scalar_select 0, %s10, %s8
  $region1: #{tpu_custom_call.1} parent=0
    #allocation2 [shape = 'u8[8192]{0}', space=vmem, size = 0x2000, scoped, tag = 'input window, operand 0, single buffered']
    #allocation3 [shape = 's32[1]{0}', space=sflag, size = 0x4, scoped, tag = 'scoped memory for tpu_custom_call.1']
    #allocation4 [shape = 's32[1]{0}', space=sflag, size = 0x4, scoped, tag = 'scoped memory for tpu_custom_call.1']
    #allocation5 [shape = 'u8[32768]{0}', space=vmem, size = 0x8000, scoped, tag = 'input window, operand 1, single buffered']
    #allocation6 [shape = 's32[1]{0}', space=sflag, size = 0x4, scoped, tag = 'scoped memory for tpu_custom_call.1']
    #allocation7 [shape = 'u8[65536]{0}', space=vmem, size = 0x10000, scoped, tag = 'input window, operand 3, single buffered']
    #allocation8 [shape = 'u8[65536]{0}', space=vmem, size = 0x10000, scoped, tag = 'input window, operand 5, single buffered']
    #allocation9 [shape = 's32[1]{0}', space=sflag, size = 0x4, scoped, tag = 'scoped memory for tpu_custom_call.1']
    #allocation10 [shape = 'u8[8192]{0}', space=vmem, size = 0x2000, scoped, tag = 'output window, operand 0, single buffered']
    %12 = vsyncpa [#allocation3], 0
    %13 = vsyncpa [#allocation6], 0
    %14 = vsyncpa [#allocation9], 0
    %15 = vsyncpa [#allocation4], 0
    // Predicated region
    $region2: #{tpu_custom_call.1} parent=1 // pred_check
      _
    $region3: #{tpu_custom_call.1} parent=1 // pred_check_branch
      %17 = sbr.rel (0) target = $region5
    $region4: #{tpu_custom_call.1} parent=1 // pred_region
      %s19 = ssub.s32 256, 256
      %20 = vsyncadd [#allocation3], %s19
      %s21 = sshll.u32 [#allocation2], 4
      %s22 = int_to_ptr.vmem [resolvable:$true] %s21
      %27 = dma.hbm_to_vmem [thread:$0]  %s0, 256, %s22, [#allocation3], 128, 128, 8
    $region5: #{tpu_custom_call.1} parent=1 // pred_fallthru
      _
    // Predicated region
    $region6: #{tpu_custom_call.1} parent=1 // pred_check
      _
    $region7: #{tpu_custom_call.1} parent=1 // pred_check_branch
      %29 = sbr.rel (0) target = $region9
    $region8: #{tpu_custom_call.1} parent=1 // pred_region
      %s31 = ssub.s32 1024, 1024
      %32 = vsyncadd [#allocation6], %s31
      %s33 = sshll.u32 [#allocation5], 4
      %s34 = int_to_ptr.vmem [resolvable:$true] %s33
      %39 = dma.hbm_to_vmem [thread:$0]  %s1, 1024, %s34, [#allocation6], 128, 128, 8
    $region9: #{tpu_custom_call.1} parent=1 // pred_fallthru
      _
    // Predicated region
    $region10: #{tpu_custom_call.1} parent=1 // pred_check
      _
    $region11: #{tpu_custom_call.1} parent=1 // pred_check_branch
      %41 = sbr.rel (0) target = $region13
    $region12: #{tpu_custom_call.1} parent=1 // pred_region
      _
    $region13: #{tpu_custom_call.1} parent=1 // pred_fallthru
      _
    // Predicated region
    $region14: #{tpu_custom_call.1} parent=1 // pred_check
      _
    $region15: #{tpu_custom_call.1} parent=1 // pred_check_branch
      %43 = sbr.rel (0) target = $region17
    $region16: #{tpu_custom_call.1} parent=1 // pred_region
      %s45 = ssub.s32 2048, 2048
      %46 = vsyncadd [#allocation6], %s45
      %s47 = sshll.u32 [#allocation7], 4
      %s48 = int_to_ptr.vmem [resolvable:$true] %s47
      %53 = dma.hbm_to_vmem [thread:$0]  %s3, 2048, %s48, [#allocation6], 128, 128, 8
    $region17: #{tpu_custom_call.1} parent=1 // pred_fallthru
      _
    // Predicated region
    $region18: #{tpu_custom_call.1} parent=1 // pred_check
      _
    $region19: #{tpu_custom_call.1} parent=1 // pred_check_branch
      %55 = sbr.rel (0) target = $region21
    $region20: #{tpu_custom_call.1} parent=1 // pred_region
      _
    $region21: #{tpu_custom_call.1} parent=1 // pred_fallthru
      _
    // Predicated region
    $region22: #{tpu_custom_call.1} parent=1 // pred_check
      _
    $region23: #{tpu_custom_call.1} parent=1 // pred_check_branch
      %57 = sbr.rel (0) target = $region25
    $region24: #{tpu_custom_call.1} parent=1 // pred_region
      %s59 = ssub.s32 2048, 2048
      %60 = vsyncadd [#allocation9], %s59
      %s61 = sshll.u32 [#allocation8], 4
      %s62 = int_to_ptr.vmem [resolvable:$true] %s61
      %67 = dma.hbm_to_vmem [thread:$0]  %s5, 2048, %s62, [#allocation9], 128, 128, 8
    $region25: #{tpu_custom_call.1} parent=1 // pred_fallthru
      _
    // Predicated region
    $region26: #{tpu_custom_call.1} parent=1 // pred_check
      _
    $region27: #{tpu_custom_call.1} parent=1 // pred_check_branch
      %69 = sbr.rel (0) target = $region29
    $region28: #{tpu_custom_call.1} parent=1 // pred_region
      _
    $region29: #{tpu_custom_call.1} parent=1 // pred_fallthru
      _
    // Predicated region
    $region30: #{tpu_custom_call.1} parent=1 // pred_check
      _
    $region31: #{tpu_custom_call.1} parent=1 // pred_check_branch
      %71 = sbr.rel (0) target = $region33
    $region32: #{tpu_custom_call.1} parent=1 // pred_region
      %72 = dma.done [#allocation3], 256
    $region33: #{tpu_custom_call.1} parent=1 // pred_fallthru
      _
    // Predicated region
    $region34: #{tpu_custom_call.1} parent=1 // pred_check
      _
    $region35: #{tpu_custom_call.1} parent=1 // pred_check_branch
      %74 = sbr.rel (0) target = $region37
    $region36: #{tpu_custom_call.1} parent=1 // pred_region
      %75 = dma.done [#allocation6], 1024
    $region37: #{tpu_custom_call.1} parent=1 // pred_fallthru
      _
    // Predicated region
    $region38: #{tpu_custom_call.1} parent=1 // pred_check
      _
    $region39: #{tpu_custom_call.1} parent=1 // pred_check_branch
      %77 = sbr.rel (0) target = $region41
    $region40: #{tpu_custom_call.1} parent=1 // pred_region
      %78 = dma.done [#allocation6], 2048
    $region41: #{tpu_custom_call.1} parent=1 // pred_fallthru
      _
    // Predicated region
    $region42: #{tpu_custom_call.1} parent=1 // pred_check
      _
    $region43: #{tpu_custom_call.1} parent=1 // pred_check_branch
      %80 = sbr.rel (0) target = $region45
    $region44: #{tpu_custom_call.1} parent=1 // pred_region
      %81 = dma.done [#allocation9], 2048
    $region45: #{tpu_custom_call.1} parent=1 // pred_fallthru
      _
    %v82 = vld [vmem:[#allocation2] sm:$0xff]
    %v83 = vld [vmem:[#allocation2 + $0x8] sm:$0xff]
    %v84 = vld [vmem:[#allocation5] sm:$0xff]
    %v85 = vld [vmem:[#allocation5 + $0x8] sm:$0xff]
    %v86 = vld [vmem:[#allocation5 + $0x10] sm:$0xff]
    %v87 = vld [vmem:[#allocation5 + $0x18] sm:$0xff]
    %v88 = vld [vmem:[#allocation5 + $0x20] sm:$0xff]
    %v89 = vld [vmem:[#allocation5 + $0x28] sm:$0xff]
    %v90 = vld [vmem:[#allocation5 + $0x30] sm:$0xff]
    %v91 = vld [vmem:[#allocation5 + $0x38] sm:$0xff]
    %v92 = vld [vmem:[%s2] sm:$0x1]
    %v94 = vlaneseq
    %v95 = vshrl.u32 %v94, 7
    %v96 = vsub.s32 0, %v95
    %v97 = vrot.slane %v92, %v96
    %vm99 = vcmask 523264
    %v101 = vsel %vm99, %v82, 0
    %v104 = vsel %vm99, %v83, 0
    %106 = vmatprep.subr.mxu0 0.0
    %107 = vmatpush1.msra.mxu0 %v84
    %108 = vmatprep.subr.mxu0 0.0
    %109 = vmatpush1.msra.mxu0 %v85
    %110 = vmatprep.subr.mxu0 0.0
    %111 = vmatpush1.msra.mxu0 %v86
    %112 = vmatprep.subr.mxu0 0.0
    %113 = vmatpush1.msra.mxu0 %v87
    %114 = vmatprep.subr.mxu0 0.0
    %115 = vmatpush1.msra.mxu0 %v88
    %116 = vmatprep.subr.mxu0 0.0
    %117 = vmatpush1.msra.mxu0 %v89
    %118 = vmatprep.subr.mxu0 0.0
    %119 = vmatpush1.msra.mxu0 %v90
    %120 = vmatprep.subr.mxu0 0.0
    %121 = vmatpush1.msra.mxu0 %v91
    %122 = vmatprep.subr.mxu0 0.0
    %123 = vmatpush1.msra.mxu0 0.0
    %124 = vmatprep.subr.mxu0 0.0
    %125 = vmatpush1.msra.mxu0 0.0
    %126 = vmatprep.subr.mxu0 0.0
    %127 = vmatpush1.msra.mxu0 0.0
    %128 = vmatprep.subr.mxu0 0.0
    %129 = vmatpush1.msra.mxu0 0.0
    %130 = vmatprep.subr.mxu0 0.0
    %131 = vmatpush1.msra.mxu0 0.0
    %132 = vmatprep.subr.mxu0 0.0
    %133 = vmatpush1.msra.mxu0 0.0
    %134 = vmatprep.subr.mxu0 0.0
    %135 = vmatpush1.msra.mxu0 0.0
    %136 = vmatprep.subr.mxu0 0.0
    %137 = vmatpush1.msra.mxu0 0.0
    %138 = vmatprep.subr.mxu0 0.0
    %139 = vmatpush1.msra.mxu0 0.0
    %140 = vmatprep.subr.mxu0 0.0
    %141 = vmatpush1.msra.mxu0 0.0
    %142 = vmatprep.subr.mxu0 0.0
    %143 = vmatpush1.msra.mxu0 0.0
    %144 = vmatprep.subr.mxu0 0.0
    %145 = vmatpush1.msra.mxu0 0.0
    %146 = vmatprep.subr.mxu0 0.0
    %147 = vmatpush1.msra.mxu0 0.0
    %148 = vmatprep.subr.mxu0 0.0
    %149 = vmatpush1.msra.mxu0 0.0
    %150 = vmatprep.subr.mxu0 0.0
    %151 = vmatpush1.msra.mxu0 0.0
    %152 = vmatprep.subr.mxu0 0.0
    %153 = vmatpush1.msra.mxu0 0.0
    %154 = vmatprep.subr.mxu0 0.0
    %155 = vmatpush1.msra.mxu0 0.0
    %156 = vmatprep.subr.mxu0 0.0
    %157 = vmatpush1.msra.mxu0 0.0
    %158 = vmatprep.subr.mxu0 0.0
    %159 = vmatpush1.msra.mxu0 0.0
    %160 = vmatprep.subr.mxu0 0.0
    %161 = vmatpush1.msra.mxu0 0.0
    %162 = vmatprep.subr.mxu0 0.0
    %163 = vmatpush1.msra.mxu0 0.0
    %164 = vmatprep.subr.mxu0 0.0
    %165 = vmatpush1.msra.mxu0 0.0
    %166 = vmatprep.subr.mxu0 0.0
    %167 = vmatpush1.msra.mxu0 0.0
    %168 = vmatprep.subr.mxu0 0.0
    %169 = vmatpush1.msra.mxu0 0.0
    %170 = vmatprep.mubr.f32.mxu0 0.0
    %171 = vmatmul.mubr.f32.gmra.mrb[0].mxu0 %v101
    %v172 = vpop.f32.mrb[0].mxu0
    %v173 = vadd.f32 %v97, %v172
    %v174 = vpop.f32.mrb[0].mxu0
    %175 = vmatprep.mubr.f32.mxu0 0.0
    %176 = vmatmul.mubr.f32.gmra.mrb[0].mxu0 %v104
    %v177 = vpop.f32.mrb[0].mxu0
    %v178 = vadd.f32 %v97, %v177
    %v179 = vpop.f32.mrb[0].mxu0
    %180 = vdwg.mxu0
    %v181 = vmax.f32 %v173, 0.0
    %v182 = vmax.f32 %v178, 0.0
    %v183 = vld [vmem:[#allocation7] sm:$0xff]
    %v184 = vld [vmem:[#allocation7 + $0x8] sm:$0xff]
    %v185 = vld [vmem:[#allocation7 + $0x10] sm:$0xff]
    %v186 = vld [vmem:[#allocation7 + $0x18] sm:$0xff]
    %v187 = vld [vmem:[#allocation7 + $0x20] sm:$0xff]
    %v188 = vld [vmem:[#allocation7 + $0x28] sm:$0xff]
    %v189 = vld [vmem:[#allocation7 + $0x30] sm:$0xff]
    %v190 = vld [vmem:[#allocation7 + $0x38] sm:$0xff]
    %v191 = vld [vmem:[#allocation7 + $0x40] sm:$0xff]
    %v192 = vld [vmem:[#allocation7 + $0x48] sm:$0xff]
    %v193 = vld [vmem:[#allocation7 + $0x50] sm:$0xff]
    %v194 = vld [vmem:[#allocation7 + $0x58] sm:$0xff]
    %v195 = vld [vmem:[#allocation7 + $0x60] sm:$0xff]
    %v196 = vld [vmem:[#allocation7 + $0x68] sm:$0xff]
    %v197 = vld [vmem:[#allocation7 + $0x70] sm:$0xff]
    %v198 = vld [vmem:[#allocation7 + $0x78] sm:$0xff]
    %v199 = vld [vmem:[%s4] sm:$0x1]
    %v201 = vlaneseq
    %v202 = vshrl.u32 %v201, 7
    %v203 = vsub.s32 0, %v202
    %v204 = vrot.slane %v199, %v203
    %206 = vmatprep.subr.mxu0 0.0
    %207 = vmatpush1.msra.mxu0 %v183
    %208 = vmatprep.subr.mxu0 0.0
    %209 = vmatpush1.msra.mxu0 %v184
    %210 = vmatprep.subr.mxu0 0.0
    %211 = vmatpush1.msra.mxu0 %v185
    %212 = vmatprep.subr.mxu0 0.0
    %213 = vmatpush1.msra.mxu0 %v186
    %214 = vmatprep.subr.mxu0 0.0
    %215 = vmatpush1.msra.mxu0 %v187
    %216 = vmatprep.subr.mxu0 0.0
    %217 = vmatpush1.msra.mxu0 %v188
    %218 = vmatprep.subr.mxu0 0.0
    %219 = vmatpush1.msra.mxu0 %v189
    %220 = vmatprep.subr.mxu0 0.0
    %221 = vmatpush1.msra.mxu0 %v190
    %222 = vmatprep.subr.mxu0 0.0
    %223 = vmatpush1.msra.mxu0 %v191
    %224 = vmatprep.subr.mxu0 0.0
    %225 = vmatpush1.msra.mxu0 %v192
    %226 = vmatprep.subr.mxu0 0.0
    %227 = vmatpush1.msra.mxu0 %v193
    %228 = vmatprep.subr.mxu0 0.0
    %229 = vmatpush1.msra.mxu0 %v194
    %230 = vmatprep.subr.mxu0 0.0
    %231 = vmatpush1.msra.mxu0 %v195
    %232 = vmatprep.subr.mxu0 0.0
    %233 = vmatpush1.msra.mxu0 %v196
    %234 = vmatprep.subr.mxu0 0.0
    %235 = vmatpush1.msra.mxu0 %v197
    %236 = vmatprep.subr.mxu0 0.0
    %237 = vmatpush1.msra.mxu0 %v198
    %238 = vmatprep.subr.mxu0 0.0
    %239 = vmatpush1.msra.mxu0 0.0
    %240 = vmatprep.subr.mxu0 0.0
    %241 = vmatpush1.msra.mxu0 0.0
    %242 = vmatprep.subr.mxu0 0.0
    %243 = vmatpush1.msra.mxu0 0.0
    %244 = vmatprep.subr.mxu0 0.0
    %245 = vmatpush1.msra.mxu0 0.0
    %246 = vmatprep.subr.mxu0 0.0
    %247 = vmatpush1.msra.mxu0 0.0
    %248 = vmatprep.subr.mxu0 0.0
    %249 = vmatpush1.msra.mxu0 0.0
    %250 = vmatprep.subr.mxu0 0.0
    %251 = vmatpush1.msra.mxu0 0.0
    %252 = vmatprep.subr.mxu0 0.0
    %253 = vmatpush1.msra.mxu0 0.0
    %254 = vmatprep.subr.mxu0 0.0
    %255 = vmatpush1.msra.mxu0 0.0
    %256 = vmatprep.subr.mxu0 0.0
    %257 = vmatpush1.msra.mxu0 0.0
    %258 = vmatprep.subr.mxu0 0.0
    %259 = vmatpush1.msra.mxu0 0.0
    %260 = vmatprep.subr.mxu0 0.0
    %261 = vmatpush1.msra.mxu0 0.0
    %262 = vmatprep.subr.mxu0 0.0
    %263 = vmatpush1.msra.mxu0 0.0
    %264 = vmatprep.subr.mxu0 0.0
    %265 = vmatpush1.msra.mxu0 0.0
    %266 = vmatprep.subr.mxu0 0.0
    %267 = vmatpush1.msra.mxu0 0.0
    %268 = vmatprep.subr.mxu0 0.0
    %269 = vmatpush1.msra.mxu0 0.0
    %270 = vmatprep.mubr.f32.mxu0 0.0
    %271 = vmatmul.mubr.f32.gmra.mrb[0].mxu0 %v181
    %v272 = vpop.f32.mrb[0].mxu0
    %v273 = vadd.f32 %v204, %v272
    %v274 = vpop.f32.mrb[0].mxu0
    %275 = vmatprep.mubr.f32.mxu0 0.0
    %276 = vmatmul.mubr.f32.gmra.mrb[0].mxu0 %v182
    %v277 = vpop.f32.mrb[0].mxu0
    %v278 = vadd.f32 %v204, %v277
    %v279 = vpop.f32.mrb[0].mxu0
    %280 = vdwg.mxu0
    %v281 = vmax.f32 %v273, 0.0
    %v282 = vmax.f32 %v278, 0.0
    %v283 = vld [vmem:[#allocation8] sm:$0xff]
    %v284 = vld [vmem:[#allocation8 + $0x8] sm:$0xff]
    %v285 = vld [vmem:[#allocation8 + $0x10] sm:$0xff]
    %v286 = vld [vmem:[#allocation8 + $0x18] sm:$0xff]
    %v287 = vld [vmem:[#allocation8 + $0x20] sm:$0xff]
    %v288 = vld [vmem:[#allocation8 + $0x28] sm:$0xff]
    %v289 = vld [vmem:[#allocation8 + $0x30] sm:$0xff]
    %v290 = vld [vmem:[#allocation8 + $0x38] sm:$0xff]
    %v291 = vld [vmem:[#allocation8 + $0x40] sm:$0xff]
    %v292 = vld [vmem:[#allocation8 + $0x48] sm:$0xff]
    %v293 = vld [vmem:[#allocation8 + $0x50] sm:$0xff]
    %v294 = vld [vmem:[#allocation8 + $0x58] sm:$0xff]
    %v295 = vld [vmem:[#allocation8 + $0x60] sm:$0xff]
    %v296 = vld [vmem:[#allocation8 + $0x68] sm:$0xff]
    %v297 = vld [vmem:[#allocation8 + $0x70] sm:$0xff]
    %v298 = vld [vmem:[#allocation8 + $0x78] sm:$0xff]
    %v299 = vld [vmem:[%s6] sm:$0x1]
    %v301 = vlaneseq
    %v302 = vshrl.u32 %v301, 7
    %v303 = vsub.s32 0, %v302
    %v304 = vrot.slane %v299, %v303
    %306 = vmatprep.subr.mxu0 0.0
    %307 = vmatpush1.msra.mxu0 %v283
    %308 = vmatprep.subr.mxu0 0.0
    %309 = vmatpush1.msra.mxu0 %v284
    %310 = vmatprep.subr.mxu0 0.0
    %311 = vmatpush1.msra.mxu0 %v285
    %312 = vmatprep.subr.mxu0 0.0
    %313 = vmatpush1.msra.mxu0 %v286
    %314 = vmatprep.subr.mxu0 0.0
    %315 = vmatpush1.msra.mxu0 %v287
    %316 = vmatprep.subr.mxu0 0.0
    %317 = vmatpush1.msra.mxu0 %v288
    %318 = vmatprep.subr.mxu0 0.0
    %319 = vmatpush1.msra.mxu0 %v289
    %320 = vmatprep.subr.mxu0 0.0
    %321 = vmatpush1.msra.mxu0 %v290
    %322 = vmatprep.subr.mxu0 0.0
    %323 = vmatpush1.msra.mxu0 %v291
    %324 = vmatprep.subr.mxu0 0.0
    %325 = vmatpush1.msra.mxu0 %v292
    %326 = vmatprep.subr.mxu0 0.0
    %327 = vmatpush1.msra.mxu0 %v293
    %328 = vmatprep.subr.mxu0 0.0
    %329 = vmatpush1.msra.mxu0 %v294
    %330 = vmatprep.subr.mxu0 0.0
    %331 = vmatpush1.msra.mxu0 %v295
    %332 = vmatprep.subr.mxu0 0.0
    %333 = vmatpush1.msra.mxu0 %v296
    %334 = vmatprep.subr.mxu0 0.0
    %335 = vmatpush1.msra.mxu0 %v297
    %336 = vmatprep.subr.mxu0 0.0
    %337 = vmatpush1.msra.mxu0 %v298
    %338 = vmatprep.subr.mxu0 0.0
    %339 = vmatpush1.msra.mxu0 0.0
    %340 = vmatprep.subr.mxu0 0.0
    %341 = vmatpush1.msra.mxu0 0.0
    %342 = vmatprep.subr.mxu0 0.0
    %343 = vmatpush1.msra.mxu0 0.0
    %344 = vmatprep.subr.mxu0 0.0
    %345 = vmatpush1.msra.mxu0 0.0
    %346 = vmatprep.subr.mxu0 0.0
    %347 = vmatpush1.msra.mxu0 0.0
    %348 = vmatprep.subr.mxu0 0.0
    %349 = vmatpush1.msra.mxu0 0.0
    %350 = vmatprep.subr.mxu0 0.0
    %351 = vmatpush1.msra.mxu0 0.0
    %352 = vmatprep.subr.mxu0 0.0
    %353 = vmatpush1.msra.mxu0 0.0
    %354 = vmatprep.subr.mxu0 0.0
    %355 = vmatpush1.msra.mxu0 0.0
    %356 = vmatprep.subr.mxu0 0.0
    %357 = vmatpush1.msra.mxu0 0.0
    %358 = vmatprep.subr.mxu0 0.0
    %359 = vmatpush1.msra.mxu0 0.0
    %360 = vmatprep.subr.mxu0 0.0
    %361 = vmatpush1.msra.mxu0 0.0
    %362 = vmatprep.subr.mxu0 0.0
    %363 = vmatpush1.msra.mxu0 0.0
    %364 = vmatprep.subr.mxu0 0.0
    %365 = vmatpush1.msra.mxu0 0.0
    %366 = vmatprep.subr.mxu0 0.0
    %367 = vmatpush1.msra.mxu0 0.0
    %368 = vmatprep.subr.mxu0 0.0
    %369 = vmatpush1.msra.mxu0 0.0
    %370 = vmatprep.mubr.f32.mxu0 0.0
    %371 = vmatmul.mubr.f32.gmra.mrb[0].mxu0 %v281
    %v372 = vpop.f32.mrb[0].mxu0
    %v373 = vadd.f32 %v304, %v372
    %v374 = vpop.f32.mrb[0].mxu0
    %375 = vmatprep.mubr.f32.mxu0 0.0
    %376 = vmatmul.mubr.f32.gmra.mrb[0].mxu0 %v282
    %v377 = vpop.f32.mrb[0].mxu0
    %v378 = vadd.f32 %v304, %v377
    %v379 = vpop.f32.mrb[0].mxu0
    %380 = vdwg.mxu0
    %381 = vst [vmem:[#allocation10] sm:$0xff] %v373
    %382 = vst [vmem:[#allocation10 + $0x8] sm:$0xff] %v378
    // Predicated region
    $region46: #{tpu_custom_call.1} parent=1 // pred_check
      _
    $region47: #{tpu_custom_call.1} parent=1 // pred_check_branch
      %384 = sbr.rel (0) target = $region49
    $region48: #{tpu_custom_call.1} parent=1 // pred_region
      %s386 = ssub.s32 256, 256
      %387 = vsyncadd [#allocation4], %s386
      %s388 = sshll.u32 [#allocation10], 4
      %s389 = int_to_ptr.vmem [resolvable:$true] %s388
      %394 = dma.vmem_to_hbm [thread:$0]  %s389, 256, %s7, [#allocation4], 128, 128, 8
    $region49: #{tpu_custom_call.1} parent=1 // pred_fallthru
      _
    // Predicated region
    $region50: #{tpu_custom_call.1} parent=1 // pred_check
      _
    $region51: #{tpu_custom_call.1} parent=1 // pred_check_branch
      %396 = sbr.rel (0) target = $region53
    $region52: #{tpu_custom_call.1} parent=1 // pred_region
      %397 = dma.done [#allocation4], 256
    $region53: #{tpu_custom_call.1} parent=1 // pred_fallthru
      _
    %398 = vsyncpa [#allocation3], 1
    %399 = vsyncpa [#allocation6], 1
    %400 = vsyncpa [#allocation9], 1
    %401 = vsyncpa [#allocation4], 1

</llo_original>
